<compile_context>
chip_gen: v5e
topology: v5e:2x2
jax: 0.10.0
libtpu: 0.0.40
codegen_flags: <defaults>
</compile_context>

<pallas_src>
import functools

import jax
import jax.numpy as jnp
from jax.experimental import pallas as pl
from jax.experimental.pallas import tpu as pltpu


# --------------------------- kernel 1: scores + normalize ---------------------------
def _scores_kernel(query_ref, k_ref, p_ref, *, sparse):
    # query_ref: (TBS, Dk)   k_ref: (TBS, N, Dk)   p_ref: (TBS, N)
    query = query_ref[...].astype(jnp.float32)
    k = k_ref[...].astype(jnp.float32)

    # scores[b, n] = <k[b, n, :], query[b, :]>   (lane reduction over Dk; tiny)
    s = jnp.sum(k * query[:, None, :], axis=-1)                   # (TBS, N)
    # shift by max (sparsemax / softmax are shift-invariant)
    z = s - jnp.max(s, axis=-1, keepdims=True)                    # (TBS, N)

    if sparse:
        # Vectorized all-pairs sparsemax over the key axis (N is small).
        ge = (z[:, None, :] >= z[:, :, None]).astype(jnp.float32)  # (TBS, N, N)
        c = jnp.sum(ge, axis=-1)                                   # rank of z_i
        ssum = jnp.sum(ge * z[:, None, :], axis=-1)                # sum of z_j >= z_i
        in_supp = (1.0 + c * z) > ssum
        tau = jnp.max(jnp.where(in_supp, (ssum - 1.0) / c, -jnp.inf),
                      axis=-1, keepdims=True)                      # (TBS, 1)
        p = jnp.maximum(z - tau, 0.0)                              # (TBS, N)
    else:
        e = jnp.exp(z)
        p = e / jnp.sum(e, axis=-1, keepdims=True)                 # exact: rows sum to 1

    p_ref[...] = p.astype(p_ref.dtype)    # == attn_orig.transpose(2, 1) for this block


# --------------------------- kernel 2: weighted sum over agents ---------------------------
def _weighted_sum_kernel(pe_ref, v_ref, out_ref):
    # pe_ref: (TB, TB*N) block-diagonal probabilities
    # v_ref:  (TB*N, TF) native-dtype feature tile (dominant HBM traffic)
    # out_ref:(TB, TF)
    pe = pe_ref[...]
    v = v_ref[...]
    if v.dtype != pe.dtype:
        # Low-precision v (int8 / fp8): keep probabilities in f32 and upcast v in-kernel —
        # correctness over speed (casting p to int8 would quantize it to 0/1).
        v = v.astype(pe.dtype)
    out_ref[...] = jnp.dot(pe, v, preferred_element_type=jnp.float32).astype(out_ref.dtype)


def _vmem_capacity_bytes():
    try:
        cap = getattr(pltpu.get_tpu_info(), "vmem_capacity_bytes", None)
        if cap:
            return int(cap)
    except Exception:
        pass
    return 64 * 1024 * 1024   # conservative default (v7x per-TensorCore VMEM)


def general_dot_product_attention(q, k, v, weight, bias, *, sparse=True, tb=8, tf_max=None):
    """q: (B,1,Dq)  k: (B,N,Dk)  v: (B,N,C,H,W)  weight: (Dk,Dq)  bias: (Dk,)."""
    B, Nq, Dq = q.shape
    assert Nq == 1, "this kernel implements the single-query (who2com) usage of the module"
    _, N, Dk = k.shape
    _, Nv, C, H, W = v.shape
    assert Nv == N
    F = C * H * W
    LANE = 128

    out_dtype = v.dtype
    v_bytes = jnp.dtype(v.dtype).itemsize
    out_bytes = jnp.dtype(out_dtype).itemsize
    if jnp.dtype(v.dtype) in (jnp.dtype(jnp.float32), jnp.dtype(jnp.bfloat16)):
        mm_dtype = v.dtype            # probabilities ride the MXU in v's dtype
    else:
        mm_dtype = jnp.float32        # keep p exact; v is upcast in-kernel
    mm_bytes = jnp.dtype(mm_dtype).itemsize

    # Hoisted Linear: one batched XLA matmul (tiny; removes it from every grid step).
    query = (jnp.einsum("bd,kd->bk", q[:, 0, :].astype(jnp.float32),
                        weight.astype(jnp.float32))
             + bias.astype(jnp.float32)[None, :])                          # (B, Dk)

    # ---------- kernel 1: attention weights (grid over batch only; tiny) ----------
    TBS = B if B <= 1024 else 1024          # equals full B, or a multiple of 8
    nbs = pl.cdiv(B, TBS)
    # NOTE: if B % TBS != 0 the tail block reads padded rows; all ops are row-wise so any
    # inf/NaN stays inside rows that are never stored — harmless by construction.
    p = pl.pallas_call(
        functools.partial(_scores_kernel, sparse=sparse),
        out_shape=jax.ShapeDtypeStruct((B, N), jnp.float32),
        grid=(nbs,),
        in_specs=[
            pl.BlockSpec((TBS, Dk), lambda b: (b, 0)),
            pl.BlockSpec((TBS, N, Dk), lambda b: (b, 0, 0)),
        ],
        out_specs=pl.BlockSpec((TBS, N), lambda b: (b, 0)),
        compiler_params=pltpu.CompilerParams(dimension_semantics=("parallel",)),
    )(query, k)

    # ---------- batch tiling for the weighted-sum kernel ----------
    # TB*N rows of v per block.  TB == B for small batches; otherwise a multiple of the
    # sublane packing unit of the output dtype (8 f32 / 16 bf16 / 32 int8), preferring a TB
    # that divides B so no partial batch blocks are produced.
    sub = {4: 8, 2: 16, 1: 32}.get(out_bytes, 8)
    tb_eff = max(int(tb), sub)
    if B <= tb_eff:
        TB = B
    else:
        TB = 0
        cand = (tb_eff // sub) * sub
        while cand >= sub:
            if B % cand == 0:
                TB = cand
                break
            cand -= sub
        if TB == 0:
            # No aligned divisor of B <= tb_eff: accept a partial tail block.  Valid output
            # rows only ever multiply padded v rows by exact-zero pe coefficients.
            TB = (tb_eff // sub) * sub
    TBN = TB * N
    nb = pl.cdiv(B, TB)

    # ---------- feature tiling: grow TF first, generation-aware VMEM budget ----------
    vmem_cap = _vmem_capacity_bytes()
    tile_budget = int(vmem_cap * 0.55)                 # double-buffered v + out tiles
    upcast_bytes = 0 if jnp.dtype(v.dtype) == jnp.dtype(mm_dtype) else mm_bytes
    per_tf = (2 * (TBN * v_bytes + TB * out_bytes)     # double-buffered v tile + out tile
              + TBN * upcast_bytes                     # in-kernel upcast copy of v (if any)
              + TB * 4)                                # f32 matmul result before cast
    budget_tf = max(LANE, (tile_budget // per_tf) // LANE * LANE)
    if tf_max is not None:
        budget_tf = min(budget_tf, max(LANE, (int(tf_max) // LANE) * LANE))
    if F <= budget_tf:
        TF = F                                         # one lane-dense tile (full dim)
    else:
        TF = budget_tf                                 # multiple of 128; last tile partial
    nf = pl.cdiv(F, TF)

    resident = per_tf * TF + 2 * TB * TBN * mm_bytes
    vmem_limit = int(min(vmem_cap * 0.85,
                         max(32 * 1024 * 1024, resident + 12 * 1024 * 1024)))

    # ---------- block-diagonal probability matrix (tiny; built once in XLA) ----------
    # pe[r, (r % TB)*N + n] = p[r, n]; all other entries are exactly 0.
    row_in_blk = jnp.arange(B, dtype=jnp.int32) % TB
    onehot = jax.nn.one_hot(row_in_blk, TB, dtype=jnp.float32)             # (B, TB)
    pe = (onehot[:, :, None] * p[:, None, :]).reshape(B, TBN).astype(mm_dtype)

    # v stays in its native dtype; reshape only (no HBM copy, no padding).
    v2d = v.reshape(B * N, F)

    out_flat = pl.pallas_call(
        _weighted_sum_kernel,
        out_shape=jax.ShapeDtypeStruct((B, F), out_dtype),
        grid=(nb, nf),
        in_specs=[
            pl.BlockSpec((TB, TBN), lambda b, f: (b, 0)),   # block-diag probabilities (tiny)
            pl.BlockSpec((TBN, TF), lambda b, f: (b, f)),   # v tile (dominant HBM traffic)
        ],
        out_specs=pl.BlockSpec((TB, TF), lambda b, f: (b, f)),  # lane-dense output slab
        compiler_params=pltpu.CompilerParams(
            dimension_semantics=("parallel", "parallel"),   # both axes shardable (v7x 2 TCs)
            vmem_limit_bytes=vmem_limit,
        ),
    )(pe, v2d)

    output = out_flat.reshape(B, C, H, W)
    attn_t = p[:, None, :]                                  # (B, 1, N)
    return output, attn_t


# ----------------------- pure-JAX reference (for checking) -----------------------
def _sparsemax_ref(z, axis):
    z = jnp.moveaxis(z, axis, -1)
    z = z - jnp.max(z, axis=-1, keepdims=True)
    zs = jnp.flip(jnp.sort(z, axis=-1), axis=-1)
    r = jnp.arange(1, z.shape[-1] + 1, dtype=z.dtype)
    cs = jnp.cumsum(zs, axis=-1)
    gt = (1.0 + r * zs) > cs
    kk = jnp.max(jnp.where(gt, r, 0.0), axis=-1, keepdims=True)
    ssum = jnp.sum(jnp.where(gt, zs, 0.0), axis=-1, keepdims=True)
    tau = (ssum - 1.0) / kk
    p = jnp.maximum(z - tau, 0.0)
    return jnp.moveaxis(p, -1, axis)


def ref_forward(q, k, v, weight, bias, sparse=True):
    query = jnp.einsum("bqi,oi->bqo", q, weight) + bias            # (B, 1, Dk)
    attn_orig = jnp.einsum("bnd,bqd->bnq", k, query)               # (B, N, 1)
    if sparse:
        attn = _sparsemax_ref(attn_orig, axis=1)
    else:
        attn = jax.nn.softmax(attn_orig, axis=1)
    out = jnp.sum(attn[:, :, :, None, None] * v, axis=1)           # (B, C, H, W)
    return out, jnp.transpose(attn, (0, 2, 1))                     # (B, 1, N)


if __name__ == "__main__":
    B, N, C, H, W = 2, 8, 4, 16, 16
    query_size, key_size = 32, 32

    key = jax.random.PRNGKey(0)
    k1, k2, k3, k4, k5 = jax.random.split(key, 5)
    q = jax.random.normal(k1, (B, 1, query_size), dtype=jnp.float32)
    kmat = jax.random.normal(k2, (B, N, key_size), dtype=jnp.float32)
    v = jax.random.normal(k3, (B, N, C, H, W), dtype=jnp.float32)
    # deterministic "Linear(query_size, key_size)" parameters
    weight = jax.random.normal(k4, (key_size, query_size), dtype=jnp.float32) / jnp.sqrt(
        jnp.float32(query_size)
    )
    bias = 0.1 * jax.random.normal(k5, (key_size,), dtype=jnp.float32)

    # sparsemax path
    out, attn = general_dot_product_attention(q, kmat, v, weight, bias, sparse=True)
    out = jax.block_until_ready(out)
    attn = jax.block_until_ready(attn)
    out_r, attn_r = ref_forward(q, kmat, v, weight, bias, sparse=True)
    assert out.shape == (B, C, H, W) and attn.shape == (B, 1, N)
    assert jnp.allclose(out, out_r, atol=1e-3, rtol=1e-3)
    assert jnp.allclose(attn, attn_r, atol=1e-4, rtol=1e-3)

    # softmax path (exact division in-kernel -> tight tolerance)
    out_s, attn_s = general_dot_product_attention(q, kmat, v, weight, bias, sparse=False)
    out_s = jax.block_until_ready(out_s)
    attn_s = jax.block_until_ready(attn_s)
    out_sr, attn_sr = ref_forward(q, kmat, v, weight, bias, sparse=False)
    assert jnp.allclose(out_s, out_sr, atol=1e-3, rtol=1e-3)
    assert jnp.allclose(attn_s, attn_sr, atol=1e-4, rtol=1e-3)

    print("KERNEL_OK")
</pallas_src>

<mosaic_0001>
module attributes {stable_mosaic.version = 11 : i64} {
  func.func @_scores_kernel(%arg0: i32, %arg1: memref<2x32xf32, #tpu.memory_space<vmem>>, %arg2: memref<2x8x32xf32, #tpu.memory_space<vmem>>, %arg3: memref<2x8xf32, #tpu.memory_space<vmem>>) attributes {dimension_semantics = [#tpu.dimension_semantics<parallel>], iteration_bounds = array<i64: 1>, scalar_prefetch = 0 : i64, scratch_operands = 0 : i64, tpu.core_type = #tpu.core_type<tc>, window_params = [{transform_indices = @transform_0, window_bounds = array<i64: 2, 32>}, {transform_indices = @transform_1, window_bounds = array<i64: 2, 8, 32>}, {transform_indices = @transform_2, window_bounds = array<i64: 2, 8>}]} {
    %c0 = arith.constant 0 : index
    %c0_0 = arith.constant 0 : index
    %0 = vector.load %arg1[%c0, %c0_0] : memref<2x32xf32, #tpu.memory_space<vmem>>, vector<2x32xf32>
    %c0_1 = arith.constant 0 : index
    %c0_2 = arith.constant 0 : index
    %c0_3 = arith.constant 0 : index
    %1 = vector.load %arg2[%c0_1, %c0_2, %c0_3] : memref<2x8x32xf32, #tpu.memory_space<vmem>>, vector<2x8x32xf32>
    %2 = vector.shape_cast %0 : vector<2x32xf32> to vector<2x1x32xf32>
    %3 = vector.broadcast %2 : vector<2x1x32xf32> to vector<2x8x32xf32>
    %4 = arith.mulf %1, %3 : vector<2x8x32xf32>
    %cst = arith.constant dense<0.000000e+00> : vector<2x8xf32>
    %5 = vector.multi_reduction <add>, %4, %cst [2] : vector<2x8x32xf32> to vector<2x8xf32>
    %cst_4 = arith.constant dense<0xFF800000> : vector<2xf32>
    %6 = vector.multi_reduction <maximumf>, %5, %cst_4 [1] : vector<2x8xf32> to vector<2xf32>
    %7 = vector.shape_cast %6 : vector<2xf32> to vector<2x1xf32>
    %8 = vector.broadcast %7 : vector<2x1xf32> to vector<2x8xf32>
    %9 = arith.subf %5, %8 : vector<2x8xf32>
    %10 = vector.shape_cast %9 : vector<2x8xf32> to vector<2x1x8xf32>
    %11 = vector.shape_cast %9 : vector<2x8xf32> to vector<2x8x1xf32>
    %12 = vector.broadcast %10 : vector<2x1x8xf32> to vector<2x8x8xf32>
    %13 = vector.broadcast %11 : vector<2x8x1xf32> to vector<2x8x8xf32>
    %14 = arith.cmpf oge, %12, %13 : vector<2x8x8xf32>
    %15 = arith.extui %14 : vector<2x8x8xi1> to vector<2x8x8xi32>
    %16 = arith.sitofp %15 : vector<2x8x8xi32> to vector<2x8x8xf32>
    %cst_5 = arith.constant dense<0.000000e+00> : vector<2x8xf32>
    %17 = vector.multi_reduction <add>, %16, %cst_5 [2] : vector<2x8x8xf32> to vector<2x8xf32>
    %18 = vector.shape_cast %9 : vector<2x8xf32> to vector<2x1x8xf32>
    %19 = vector.broadcast %18 : vector<2x1x8xf32> to vector<2x8x8xf32>
    %20 = arith.mulf %16, %19 : vector<2x8x8xf32>
    %cst_6 = arith.constant dense<0.000000e+00> : vector<2x8xf32>
    %21 = vector.multi_reduction <add>, %20, %cst_6 [2] : vector<2x8x8xf32> to vector<2x8xf32>
    %22 = arith.mulf %17, %9 : vector<2x8xf32>
    %cst_7 = arith.constant 1.000000e+00 : f32
    %23 = vector.broadcast %cst_7 : f32 to vector<2x8xf32>
    %24 = arith.addf %23, %22 : vector<2x8xf32>
    %25 = arith.cmpf ogt, %24, %21 : vector<2x8xf32>
    %cst_8 = arith.constant 1.000000e+00 : f32
    %26 = vector.broadcast %cst_8 : f32 to vector<2x8xf32>
    %27 = arith.subf %21, %26 : vector<2x8xf32>
    %28 = arith.divf %27, %17 : vector<2x8xf32>
    %cst_9 = arith.constant 0xFF800000 : f32
    %29 = vector.broadcast %cst_9 : f32 to vector<2x8xf32>
    %30 = arith.select %25, %28, %29 : vector<2x8xi1>, vector<2x8xf32>
    %cst_10 = arith.constant dense<0xFF800000> : vector<2xf32>
    %31 = vector.multi_reduction <maximumf>, %30, %cst_10 [1] : vector<2x8xf32> to vector<2xf32>
    %32 = vector.shape_cast %31 : vector<2xf32> to vector<2x1xf32>
    %33 = vector.broadcast %32 : vector<2x1xf32> to vector<2x8xf32>
    %34 = arith.subf %9, %33 : vector<2x8xf32>
    %cst_11 = arith.constant 0.000000e+00 : f32
    %35 = vector.broadcast %cst_11 : f32 to vector<2x8xf32>
    %36 = arith.maximumf %34, %35 : vector<2x8xf32>
    %c0_12 = arith.constant 0 : index
    %c0_13 = arith.constant 0 : index
    %37 = vector.load %arg3[%c0_12, %c0_13] : memref<2x8xf32, #tpu.memory_space<vmem>>, vector<2x8xf32>
    tpu.vector_store %arg3[%c0_12, %c0_13], %36 {strides = array<i32>} : memref<2x8xf32, #tpu.memory_space<vmem>>, vector<2x8xf32>,
    return
  }
  func.func @transform_0(%arg0: i32) -> (i32, i32) {
    %c0_i32 = arith.constant 0 : i32
    %c0_i32_0 = arith.constant 0 : i32
    return %arg0, %c0_i32 : i32, i32
  }
  func.func @transform_1(%arg0: i32) -> (i32, i32, i32) {
    %c0_i32 = arith.constant 0 : i32
    %c0_i32_0 = arith.constant 0 : i32
    %c0_i32_1 = arith.constant 0 : i32
    return %arg0, %c0_i32, %c0_i32_0 : i32, i32, i32
  }
  func.func @transform_2(%arg0: i32) -> (i32, i32) {
    %c0_i32 = arith.constant 0 : i32
    %c0_i32_0 = arith.constant 0 : i32
    return %arg0, %c0_i32 : i32, i32
  }
}

</mosaic_0001>

<llo_original>
// kernel: tpu_custom_call.1
$region0: #{tpu_custom_call.1}
  #allocation0 [shape = 'u32[]', space=smem, size = 0x4, offset = 0x4, fixed_abs, tag = 'smem constant byte address 0x4 - core index']
  #allocation1 [shape = 'u32[72,128]{1,0:T(1,128)}', space=vmem, size = 0x9000, scoped, tag = 'internal scratch']
  %s0 = inlined_call_operand.hbm [shape: f32[2,32], index: 0, kind: input, shape index: {}]
  %s1 = inlined_call_operand.hbm [shape: f32[2,8,32], index: 1, kind: input, shape index: {}]
  %s2 = inlined_call_operand.hbm [shape: f32[2,8], index: 2, kind: output, shape index: {}]
  %s3 = sld [smem:[#allocation0]]
  $region26: #{tpu_custom_call.1} parent=0
    _
  %s5 = ssub.s32 1, %s3
  %s6 = scalar_select 0, %s5, %s3
  $region1: #{tpu_custom_call.1} parent=0
    #allocation2 [shape = 'u8[1024]{0}', space=vmem, size = 0x400, scoped, tag = 'input window, operand 0, single buffered']
    #allocation3 [shape = 's32[1]{0}', space=sflag, size = 0x4, scoped, tag = 'scoped memory for tpu_custom_call.1']
    #allocation4 [shape = 's32[1]{0}', space=sflag, size = 0x4, scoped, tag = 'scoped memory for tpu_custom_call.1']
    #allocation5 [shape = 'u8[8192]{0}', space=vmem, size = 0x2000, scoped, tag = 'input window, operand 1, single buffered']
    #allocation6 [shape = 's32[1]{0}', space=sflag, size = 0x4, scoped, tag = 'scoped memory for tpu_custom_call.1']
    #allocation7 [shape = 'u8[1024]{0}', space=vmem, size = 0x400, scoped, tag = 'output window, operand 0, single buffered']
    %7 = vsyncpa [#allocation3], 0
    %8 = vsyncpa [#allocation6], 0
    %9 = vsyncpa [#allocation4], 0
    // Predicated region
    $region2: #{tpu_custom_call.1} parent=1 // pred_check
      _
    $region3: #{tpu_custom_call.1} parent=1 // pred_check_branch
      %11 = sbr.rel (0) target = $region5
    $region4: #{tpu_custom_call.1} parent=1 // pred_region
      %13 = vsyncadd [#allocation3], 0
      %s15 = sshll.u32 %s0, 4
      %s16 = int_to_ptr.hbm [resolvable:$true] %s15
      %s17 = sshll.u32 [#allocation2], 4
      %s18 = int_to_ptr.vmem [resolvable:$true] %s17
      %20 = dma.hbm_to_vmem [thread:$0]  %s16, 32, %s18, [#allocation3]
    $region5: #{tpu_custom_call.1} parent=1 // pred_fallthru
      _
    // Predicated region
    $region6: #{tpu_custom_call.1} parent=1 // pred_check
      _
    $region7: #{tpu_custom_call.1} parent=1 // pred_check_branch
      %22 = sbr.rel (0) target = $region9
    $region8: #{tpu_custom_call.1} parent=1 // pred_region
      %24 = vsyncadd [#allocation6], 0
      %s25 = sshll.u32 %s1, 4
      %s26 = int_to_ptr.hbm [resolvable:$true] %s25
      %s27 = sshll.u32 [#allocation5], 4
      %s28 = int_to_ptr.vmem [resolvable:$true] %s27
      %33 = dma.hbm_to_vmem [thread:$0]  %s26, 256, %s28, [#allocation6], 128, 128, 8
    $region9: #{tpu_custom_call.1} parent=1 // pred_fallthru
      _
    // Predicated region
    $region10: #{tpu_custom_call.1} parent=1 // pred_check
      _
    $region11: #{tpu_custom_call.1} parent=1 // pred_check_branch
      %35 = sbr.rel (0) target = $region13
    $region12: #{tpu_custom_call.1} parent=1 // pred_region
      %37 = dma.done [#allocation3], 32
    $region13: #{tpu_custom_call.1} parent=1 // pred_fallthru
      _
    // Predicated region
    $region14: #{tpu_custom_call.1} parent=1 // pred_check
      _
    $region15: #{tpu_custom_call.1} parent=1 // pred_check_branch
      %39 = sbr.rel (0) target = $region17
    $region16: #{tpu_custom_call.1} parent=1 // pred_region
      %41 = dma.done [#allocation6], 256
    $region17: #{tpu_custom_call.1} parent=1 // pred_fallthru
      _
    %v42 = vld [vmem:[#allocation2] sm:$0x3]
    %v43 = vld [vmem:[#allocation5] sm:$0xff]
    %v44 = vld [vmem:[#allocation5 + $0x8] sm:$0xff]
    %v46 = vrot.slane %v42, 1
    %v47 = vperm.slane %v42, 0
    %v48 = vperm.slane %v46, 0
    %v51 = vmul.f32 %v43, %v47
    %v52 = vmul.f32 %v44, %v48
    %vm53 = vcmask 261120
    %v54 = vsel %vm53, %v51, 0.0
    %55 = vadd.xlane.f32.xlu0 %v54
    %v56 = vpop.xlane.xlu0 %55
    %v57 = vsel %vm53, %v52, 0.0
    %58 = vadd.xlane.f32.xlu0 %v57
    %v59 = vpop.xlane.xlu0 %58
    %v62 = vlaneseq
    %v63 = vand.u32 %v62, 127
    %v64 = vperm.slane %v56, %v63
    %v65 = vperm.slane %v59, %v63
    %vm66 = vcmask 1041409
    %v67 = vsel %vm66, %v65, %v64
    %vm69 = vcmask 58368
    %v70 = vsel %vm69, %v67, -inf
    %71 = vmax.xlane.f32.xlu0 %v70
    %v72 = vpop.xlane.xlu0 %71
    %v74 = vperm.slane %v72, 0
    %v75 = vperm.slane %v72, 1
    %v78 = vsub.f32 %v56, %v74
    %v79 = vsub.f32 %v59, %v75
    %81 = vset.pattern.permute.xlu0 0
    %82 = vperm.xlu0 %81, %v78
    %v83 = vpop.permute.xlu0 %82
    %85 = vset.pattern.permute.xlu0 0
    %86 = vperm.xlu0 %85, %v79
    %v87 = vpop.permute.xlu0 %86
    %v88 = vperm.slane %v83, 0
    %v89 = vperm.slane %v83, 1
    %v90 = vperm.slane %v83, 2
    %v91 = vperm.slane %v83, 3
    %v92 = vperm.slane %v83, 4
    %v93 = vperm.slane %v83, 5
    %v94 = vperm.slane %v83, 6
    %v95 = vperm.slane %v83, 7
    %v96 = vperm.slane %v87, 0
    %v97 = vperm.slane %v87, 1
    %v98 = vperm.slane %v87, 2
    %v99 = vperm.slane %v87, 3
    %v100 = vperm.slane %v87, 4
    %v101 = vperm.slane %v87, 5
    %v102 = vperm.slane %v87, 6
    %v103 = vperm.slane %v87, 7
    %vm120 = vcmp.ge.f32.partialorder %v78, %v88
    %vm121 = vcmp.ge.f32.partialorder %v78, %v89
    %vm122 = vcmp.ge.f32.partialorder %v78, %v90
    %vm123 = vcmp.ge.f32.partialorder %v78, %v91
    %vm124 = vcmp.ge.f32.partialorder %v78, %v92
    %vm125 = vcmp.ge.f32.partialorder %v78, %v93
    %vm126 = vcmp.ge.f32.partialorder %v78, %v94
    %vm127 = vcmp.ge.f32.partialorder %v78, %v95
    %vm128 = vcmp.ge.f32.partialorder %v79, %v96
    %vm129 = vcmp.ge.f32.partialorder %v79, %v97
    %vm130 = vcmp.ge.f32.partialorder %v79, %v98
    %vm131 = vcmp.ge.f32.partialorder %v79, %v99
    %vm132 = vcmp.ge.f32.partialorder %v79, %v100
    %vm133 = vcmp.ge.f32.partialorder %v79, %v101
    %vm134 = vcmp.ge.f32.partialorder %v79, %v102
    %vm135 = vcmp.ge.f32.partialorder %v79, %v103
    %v136 = vsel %vm120, 1, 0
    %v137 = vsel %vm121, 1, 0
    %v138 = vsel %vm122, 1, 0
    %v139 = vsel %vm123, 1, 0
    %v140 = vsel %vm124, 1, 0
    %v141 = vsel %vm125, 1, 0
    %v142 = vsel %vm126, 1, 0
    %v143 = vsel %vm127, 1, 0
    %v144 = vsel %vm128, 1, 0
    %v145 = vsel %vm129, 1, 0
    %v146 = vsel %vm130, 1, 0
    %v147 = vsel %vm131, 1, 0
    %v148 = vsel %vm132, 1, 0
    %v149 = vsel %vm133, 1, 0
    %v150 = vsel %vm134, 1, 0
    %v151 = vsel %vm135, 1, 0
    %v152 = vcvt.s32.f32 %v136
    %v153 = vcvt.s32.f32 %v137
    %v154 = vcvt.s32.f32 %v138
    %v155 = vcvt.s32.f32 %v139
    %v156 = vcvt.s32.f32 %v140
    %v157 = vcvt.s32.f32 %v141
    %v158 = vcvt.s32.f32 %v142
    %v159 = vcvt.s32.f32 %v143
    %v160 = vcvt.s32.f32 %v144
    %v161 = vcvt.s32.f32 %v145
    %v162 = vcvt.s32.f32 %v146
    %v163 = vcvt.s32.f32 %v147
    %v164 = vcvt.s32.f32 %v148
    %v165 = vcvt.s32.f32 %v149
    %v166 = vcvt.s32.f32 %v150
    %v167 = vcvt.s32.f32 %v151
    %184 = vset.pattern.permute.xlu0 0
    %185 = vperm.xlu0 %184, %v152
    %v186 = vpop.permute.xlu0 %185
    %187 = vset.pattern.permute.xlu0 0
    %188 = vperm.xlu0 %187, %v153
    %v189 = vpop.permute.xlu0 %188
    %190 = vset.pattern.permute.xlu0 0
    %191 = vperm.xlu0 %190, %v154
    %v192 = vpop.permute.xlu0 %191
    %193 = vset.pattern.permute.xlu0 0
    %194 = vperm.xlu0 %193, %v155
    %v195 = vpop.permute.xlu0 %194
    %196 = vset.pattern.permute.xlu0 0
    %197 = vperm.xlu0 %196, %v156
    %v198 = vpop.permute.xlu0 %197
    %199 = vset.pattern.permute.xlu0 0
    %200 = vperm.xlu0 %199, %v157
    %v201 = vpop.permute.xlu0 %200
    %202 = vset.pattern.permute.xlu0 0
    %203 = vperm.xlu0 %202, %v158
    %v204 = vpop.permute.xlu0 %203
    %205 = vset.pattern.permute.xlu0 0
    %206 = vperm.xlu0 %205, %v159
    %v207 = vpop.permute.xlu0 %206
    %208 = vset.pattern.permute.xlu0 0
    %209 = vperm.xlu0 %208, %v160
    %v210 = vpop.permute.xlu0 %209
    %211 = vset.pattern.permute.xlu0 0
    %212 = vperm.xlu0 %211, %v161
    %v213 = vpop.permute.xlu0 %212
    %214 = vset.pattern.permute.xlu0 0
    %215 = vperm.xlu0 %214, %v162
    %v216 = vpop.permute.xlu0 %215
    %217 = vset.pattern.permute.xlu0 0
    %218 = vperm.xlu0 %217, %v163
    %v219 = vpop.permute.xlu0 %218
    %220 = vset.pattern.permute.xlu0 0
    %221 = vperm.xlu0 %220, %v164
    %v222 = vpop.permute.xlu0 %221
    %223 = vset.pattern.permute.xlu0 0
    %224 = vperm.xlu0 %223, %v165
    %v225 = vpop.permute.xlu0 %224
    %226 = vset.pattern.permute.xlu0 0
    %227 = vperm.xlu0 %226, %v166
    %v228 = vpop.permute.xlu0 %227
    %229 = vset.pattern.permute.xlu0 0
    %230 = vperm.xlu0 %229, %v167
    %v231 = vpop.permute.xlu0 %230
    %v232 = vperm.slane %v186, %v63
    %v233 = vperm.slane %v189, %v63
    %v234 = vperm.slane %v192, %v63
    %v235 = vperm.slane %v195, %v63
    %v236 = vperm.slane %v198, %v63
    %v237 = vperm.slane %v201, %v63
    %v238 = vperm.slane %v204, %v63
    %v239 = vperm.slane %v207, %v63
    %v240 = vperm.slane %v210, %v63
    %v241 = vperm.slane %v213, %v63
    %v242 = vperm.slane %v216, %v63
    %v243 = vperm.slane %v219, %v63
    %v244 = vperm.slane %v222, %v63
    %v245 = vperm.slane %v225, %v63
    %v246 = vperm.slane %v228, %v63
    %v247 = vperm.slane %v231, %v63
    %v248 = vsel %vm66, %v233, %v232
    %vm249 = vcmask 1042434
    %v250 = vsel %vm249, %v234, %v248
    %vm251 = vcmask 1043459
    %v252 = vsel %vm251, %v235, %v250
    %vm253 = vcmask 1044484
    %v254 = vsel %vm253, %v236, %v252
    %vm255 = vcmask 1045509
    %v256 = vsel %vm255, %v237, %v254
    %vm257 = vcmask 1046534
    %v258 = vsel %vm257, %v238, %v256
    %vm259 = vcmask 1047559
    %v260 = vsel %vm259, %v239, %v258
    %v261 = vsel %vm66, %v241, %v240
    %v262 = vsel %vm249, %v242, %v261
    %v263 = vsel %vm251, %v243, %v262
    %v264 = vsel %vm253, %v244, %v263
    %v265 = vsel %vm255, %v245, %v264
    %v266 = vsel %vm257, %v246, %v265
    %v267 = vsel %vm259, %v247, %v266
    %vm270 = vcmask 64512
    %v271 = vsel %vm270, %v260, 0.0
    %272 = vadd.xlane.f32.xlu0 %v271
    %v273 = vpop.xlane.xlu0 %272
    %v274 = vsel %vm270, %v267, 0.0
    %275 = vadd.xlane.f32.xlu0 %v274
    %v276 = vpop.xlane.xlu0 %275
    %v277 = vmul.f32 %v152, %v78
    %v278 = vmul.f32 %v153, %v78
    %v279 = vmul.f32 %v154, %v78
    %v280 = vmul.f32 %v155, %v78
    %v281 = vmul.f32 %v156, %v78
    %v282 = vmul.f32 %v157, %v78
    %v283 = vmul.f32 %v158, %v78
    %v284 = vmul.f32 %v159, %v78
    %v285 = vmul.f32 %v160, %v79
    %v286 = vmul.f32 %v161, %v79
    %v287 = vmul.f32 %v162, %v79
    %v288 = vmul.f32 %v163, %v79
    %v289 = vmul.f32 %v164, %v79
    %v290 = vmul.f32 %v165, %v79
    %v291 = vmul.f32 %v166, %v79
    %v292 = vmul.f32 %v167, %v79
    %309 = vset.pattern.permute.xlu0 0
    %310 = vperm.xlu0 %309, %v277
    %v311 = vpop.permute.xlu0 %310
    %312 = vset.pattern.permute.xlu0 0
    %313 = vperm.xlu0 %312, %v278
    %v314 = vpop.permute.xlu0 %313
    %315 = vset.pattern.permute.xlu0 0
    %316 = vperm.xlu0 %315, %v279
    %v317 = vpop.permute.xlu0 %316
    %318 = vset.pattern.permute.xlu0 0
    %319 = vperm.xlu0 %318, %v280
    %v320 = vpop.permute.xlu0 %319
    %321 = vset.pattern.permute.xlu0 0
    %322 = vperm.xlu0 %321, %v281
    %v323 = vpop.permute.xlu0 %322
    %324 = vset.pattern.permute.xlu0 0
    %325 = vperm.xlu0 %324, %v282
    %v326 = vpop.permute.xlu0 %325
    %327 = vset.pattern.permute.xlu0 0
    %328 = vperm.xlu0 %327, %v283
    %v329 = vpop.permute.xlu0 %328
    %330 = vset.pattern.permute.xlu0 0
    %331 = vperm.xlu0 %330, %v284
    %v332 = vpop.permute.xlu0 %331
    %333 = vset.pattern.permute.xlu0 0
    %334 = vperm.xlu0 %333, %v285
    %v335 = vpop.permute.xlu0 %334
    %336 = vset.pattern.permute.xlu0 0
    %337 = vperm.xlu0 %336, %v286
    %v338 = vpop.permute.xlu0 %337
    %339 = vset.pattern.permute.xlu0 0
    %340 = vperm.xlu0 %339, %v287
    %v341 = vpop.permute.xlu0 %340
    %342 = vset.pattern.permute.xlu0 0
    %343 = vperm.xlu0 %342, %v288
    %v344 = vpop.permute.xlu0 %343
    %345 = vset.pattern.permute.xlu0 0
    %346 = vperm.xlu0 %345, %v289
    %v347 = vpop.permute.xlu0 %346
    %348 = vset.pattern.permute.xlu0 0
    %349 = vperm.xlu0 %348, %v290
    %v350 = vpop.permute.xlu0 %349
    %351 = vset.pattern.permute.xlu0 0
    %352 = vperm.xlu0 %351, %v291
    %v353 = vpop.permute.xlu0 %352
    %354 = vset.pattern.permute.xlu0 0
    %355 = vperm.xlu0 %354, %v292
    %v356 = vpop.permute.xlu0 %355
    %v357 = vperm.slane %v311, %v63
    %v358 = vperm.slane %v314, %v63
    %v359 = vperm.slane %v317, %v63
    %v360 = vperm.slane %v320, %v63
    %v361 = vperm.slane %v323, %v63
    %v362 = vperm.slane %v326, %v63
    %v363 = vperm.slane %v329, %v63
    %v364 = vperm.slane %v332, %v63
    %v365 = vperm.slane %v335, %v63
    %v366 = vperm.slane %v338, %v63
    %v367 = vperm.slane %v341, %v63
    %v368 = vperm.slane %v344, %v63
    %v369 = vperm.slane %v347, %v63
    %v370 = vperm.slane %v350, %v63
    %v371 = vperm.slane %v353, %v63
    %v372 = vperm.slane %v356, %v63
    %v373 = vsel %vm66, %v358, %v357
    %v374 = vsel %vm249, %v359, %v373
    %v375 = vsel %vm251, %v360, %v374
    %v376 = vsel %vm253, %v361, %v375
    %v377 = vsel %vm255, %v362, %v376
    %v378 = vsel %vm257, %v363, %v377
    %v379 = vsel %vm259, %v364, %v378
    %v380 = vsel %vm66, %v366, %v365
    %v381 = vsel %vm249, %v367, %v380
    %v382 = vsel %vm251, %v368, %v381
    %v383 = vsel %vm253, %v369, %v382
    %v384 = vsel %vm255, %v370, %v383
    %v385 = vsel %vm257, %v371, %v384
    %v386 = vsel %vm259, %v372, %v385
    %v389 = vsel %vm270, %v379, 0.0
    %390 = vadd.xlane.f32.xlu0 %v389
    %v391 = vpop.xlane.xlu0 %390
    %v392 = vsel %vm270, %v386, 0.0
    %393 = vadd.xlane.f32.xlu0 %v392
    %v394 = vpop.xlane.xlu0 %393
    %v395 = vmul.f32 %v273, %v78
    %v396 = vmul.f32 %v276, %v79
    %v397 = vadd.f32 %v395, 1.0
    %v398 = vadd.f32 %v396, 1.0
    %vm399 = vcmp.gt.f32.partialorder %v397, %v391
    %vm400 = vcmp.gt.f32.partialorder %v398, %v394
    %v401 = vsub.f32 %v391, 1.0
    %v402 = vsub.f32 %v394, 1.0
    %v403 = vrcp.pop %v273
    %v404 = vmul.f32 %v273, %v403
    %v405 = vsub.f32 1.0, %v404
    %v406 = vmul.f32 %v403, %v405
    %v407 = vadd.f32 %v403, %v406
    %vm408 = vweird.f32 %v273
    %vm409 = vweird.f32 %v403
    %vm410 = vmor %vm408, %vm409
    %v411 = vsel %vm410, %v403, %v407
    %v412 = vand.u32 2147483647, %v273
    %vm413 = vcmp.eq.f32.partialorder %v412, 8.507059e+37
    %v414 = vand.u32 %v273, 2147483648
    %v415 = vor.u32 1.1754944e-38, %v414
    %v416 = vsel %vm413, %v415, %v411
    %v417 = vmul.f32 %v401, %v416
    %v418 = vrcp.pop %v276
    %v419 = vmul.f32 %v276, %v418
    %v420 = vsub.f32 1.0, %v419
    %v421 = vmul.f32 %v418, %v420
    %v422 = vadd.f32 %v418, %v421
    %vm423 = vweird.f32 %v276
    %vm424 = vweird.f32 %v418
    %vm425 = vmor %vm423, %vm424
    %v426 = vsel %vm425, %v418, %v422
    %v427 = vand.u32 2147483647, %v276
    %vm428 = vcmp.eq.f32.partialorder %v427, 8.507059e+37
    %v429 = vand.u32 %v276, 2147483648
    %v430 = vor.u32 1.1754944e-38, %v429
    %v431 = vsel %vm428, %v430, %v426
    %v432 = vmul.f32 %v402, %v431
    %v433 = vsel %vm399, %v417, -inf
    %v434 = vsel %vm400, %v432, -inf
    %437 = vset.pattern.permute.xlu0 0
    %438 = vperm.xlu0 %437, %v433
    %v439 = vpop.permute.xlu0 %438
    %440 = vset.pattern.permute.xlu0 0
    %441 = vperm.xlu0 %440, %v434
    %v442 = vpop.permute.xlu0 %441
    %v443 = vperm.slane %v439, %v63
    %v444 = vperm.slane %v442, %v63
    %v445 = vsel %vm66, %v444, %v443
    %v447 = vsel %vm69, %v445, -inf
    %448 = vmax.xlane.f32.xlu0 %v447
    %v449 = vpop.xlane.xlu0 %448
    %v451 = vperm.slane %v449, 0
    %v452 = vperm.slane %v449, 1
    %v455 = vsub.f32 %v78, %v451
    %v456 = vsub.f32 %v79, %v452
    %v457 = vmax.f32 %v455, 0.0
    %v458 = vmax.f32 %v456, 0.0
    %461 = vset.pattern.permute.xlu0 0
    %462 = vperm.xlu0 %461, %v457
    %v463 = vpop.permute.xlu0 %462
    %464 = vset.pattern.permute.xlu0 0
    %465 = vperm.xlu0 %464, %v458
    %v466 = vpop.permute.xlu0 %465
    %v467 = vperm.slane %v463, %v63
    %v468 = vperm.slane %v466, %v63
    %v469 = vsel %vm66, %v468, %v467
    %471 = vst.msk [vmem:[#allocation7] sm:$0x3] %vm69, %v469
    // Predicated region
    $region18: #{tpu_custom_call.1} parent=1 // pred_check
      _
    $region19: #{tpu_custom_call.1} parent=1 // pred_check_branch
      %473 = sbr.rel (0) target = $region21
    $region20: #{tpu_custom_call.1} parent=1 // pred_region
      %475 = vsyncadd [#allocation4], 0
      %s477 = sshll.u32 [#allocation7], 4
      %s478 = int_to_ptr.vmem [resolvable:$true] %s477
      %s479 = sshll.u32 %s2, 4
      %s480 = int_to_ptr.hbm [resolvable:$true] %s479
      %482 = dma.vmem_to_hbm [thread:$0]  %s478, 32, %s480, [#allocation4]
    $region21: #{tpu_custom_call.1} parent=1 // pred_fallthru
      _
    // Predicated region
    $region22: #{tpu_custom_call.1} parent=1 // pred_check
      _
    $region23: #{tpu_custom_call.1} parent=1 // pred_check_branch
      %484 = sbr.rel (0) target = $region25
    $region24: #{tpu_custom_call.1} parent=1 // pred_region
      %486 = dma.done [#allocation4], 32
    $region25: #{tpu_custom_call.1} parent=1 // pred_fallthru
      _
    %487 = vsyncpa [#allocation3], 1
    %488 = vsyncpa [#allocation6], 1
    %489 = vsyncpa [#allocation4], 1

</llo_original>
